<compile_context>
chip_gen: v7x
topology: tpu7x:2x2x1
jax: 0.10.0
libtpu: 0.0.40
codegen_flags: <defaults>
</compile_context>

<pallas_src>
import jax
import jax.numpy as jnp
from jax import lax
from jax.experimental import pallas as pl
from jax.experimental.pallas import tpu as pltpu

LANES = 128
NCORES = 2            # leading "parallel" grid axis (2 TCs on v7x; serial loop on v5e/v6e)
MAX_TILE_ROWS = 2048  # 2048 * 128 = 262,144 flattened samples per grid step


def _make_confusion_kernel(tile_rows, steps_per_core, m_valid, has_weight):
    """Builds the per-core weighted-confusion accumulation kernel."""

    def kernel(*refs):
        if has_weight:
            preds_ref, labels_ref, weight_ref, out_ref, acc_ref = refs
        else:
            preds_ref, labels_ref, out_ref, acc_ref = refs
            weight_ref = None

        c = pl.program_id(0)          # core-split axis
        i = pl.program_id(1)          # reduction axis (per-core steps)
        n_i = pl.num_programs(1)

        @pl.when(i == 0)
        def _init():
            acc_ref[...] = jnp.zeros_like(acc_ref)

        # Element-level validity mask.  Covers: the pad-to-128 tail, the
        # partial last tile of the grid, and core-1 "phantom" steps when the
        # block count is odd.  It is computed from the *unclamped* linear
        # block position, so clamped (re-read) blocks contribute exactly zero.
        shape = (tile_rows, LANES)
        row = lax.broadcasted_iota(jnp.int32, shape, 0)
        lane = lax.broadcasted_iota(jnp.int32, shape, 1)
        base = (c * steps_per_core + i) * (tile_rows * LANES)
        valid = (base + row * LANES + lane) < m_valid

        # preds are integer-typed -> always finite, no mask needed.
        preds = preds_ref[...].astype(jnp.float32)
        # labels / weight are masked with jnp.where (not multiply) so garbage
        # (possibly NaN) contents of out-of-bounds tile regions never propagate.
        labels = jnp.where(valid, labels_ref[...].astype(jnp.float32), 0.0)
        if has_weight:
            w = jnp.where(valid, weight_ref[...].astype(jnp.float32), 0.0)
        else:
            w = jnp.where(valid, 1.0, 0.0)

        pw = preds * w                 # preds * weight
        npw = w - pw                   # (1 - preds) * weight
        tp = pw * labels               # preds * labels * weight
        fp = pw - tp                   # preds * (1 - labels) * weight
        fn = npw * labels              # (1 - preds) * labels * weight
        tn = npw - fn                  # (1 - preds) * (1 - labels) * weight

        # Sublane-only reductions -> (1, 128) lane vectors, accumulated in a
        # (4, 128) f32 VMEM scratch (cross-lane reduce happens once, outside).
        acc_ref[0:1, :] += jnp.sum(tp, axis=0, keepdims=True)
        acc_ref[1:2, :] += jnp.sum(fp, axis=0, keepdims=True)
        acc_ref[2:3, :] += jnp.sum(tn, axis=0, keepdims=True)
        acc_ref[3:4, :] += jnp.sum(fn, axis=0, keepdims=True)

        @pl.when(i == n_i - 1)
        def _finalize():
            out_ref[...] = acc_ref[...]        # per-core (4, 128) partial

    return kernel


def prf1_tracker_forward(logits, labels, weight=None):
    """PRF1Tracker.forward over CMWithLogitsMetric values, fused on TPU.

    logits: (B, N, C) float; labels: (B, N) in {0, 1}; weight: (B, N) or None.
    Returns a dict with P, R, F1, accuracy (plus the summed TP/FP/TN/FN).
    """
    B, N, C = logits.shape
    M = B * N
    has_weight = weight is not None

    # argmax over the class axis in the wrapper (native logits layout).  The
    # int8 cast fuses into the argmax epilogue, so preds are written narrow.
    preds = jnp.argmax(logits, axis=-1).reshape(M)
    if C <= 127:
        preds = preds.astype(jnp.int8)

    labels_flat = labels.reshape(M)
    if labels_flat.dtype == jnp.bool_:
        labels_flat = labels_flat.astype(jnp.int8)
    elif labels_flat.dtype.itemsize > 4:
        labels_flat = labels_flat.astype(
            jnp.int32 if jnp.issubdtype(labels_flat.dtype, jnp.integer)
            else jnp.float32)

    streams = [preds, labels_flat]
    if has_weight:
        w_flat = weight.reshape(M)
        if w_flat.dtype not in (jnp.float32, jnp.bfloat16, jnp.float16):
            w_flat = w_flat.astype(jnp.float32)
        streams.append(w_flat)

    # Lane-dense, full-sublane layout: (rows, 128).  Only the small side
    # streams are padded, and only when M is not a multiple of 128.
    m_pad = ((M + LANES - 1) // LANES) * LANES
    if m_pad != M:
        streams = [jnp.pad(s, (0, m_pad - M)) for s in streams]
    rows = m_pad // LANES
    streams = [s.reshape(rows, LANES) for s in streams]

    tile_rows = rows if rows <= MAX_TILE_ROWS else MAX_TILE_ROWS
    n_blocks = (rows + tile_rows - 1) // tile_rows
    spc = (n_blocks + NCORES - 1) // NCORES        # grid steps per core

    def in_map(c, i):
        # Clamp so "phantom" steps (odd block count / single block) re-read the
        # previous block instead of going fully out of bounds; their
        # contribution is masked to zero inside the kernel.
        return (jnp.minimum(c * spc + i, n_blocks - 1), 0)

    in_specs = [pl.BlockSpec((tile_rows, LANES), in_map) for _ in streams]
    # Per-core partial output: (NCORES, 4, 128); each core owns one row.
    out_spec = pl.BlockSpec((None, 4, LANES), lambda c, i: (c, 0, 0))

    in_bytes = sum(tile_rows * LANES * s.dtype.itemsize for s in streams)
    vmem_limit = int(min(32 << 20, max(16 << 20, 2 * in_bytes + (4 << 20))))

    kernel = _make_confusion_kernel(tile_rows, spc, M, has_weight)

    partials = pl.pallas_call(
        kernel,
        out_shape=jax.ShapeDtypeStruct((NCORES, 4, LANES), jnp.float32),
        grid_spec=pltpu.PrefetchScalarGridSpec(
            num_scalar_prefetch=0,
            grid=(NCORES, spc),
            in_specs=in_specs,
            out_specs=out_spec,
            scratch_shapes=[pltpu.VMEM((4, LANES), jnp.float32)],
        ),
        compiler_params=pltpu.CompilerParams(
            dimension_semantics=("parallel", "arbitrary"),
            vmem_limit_bytes=vmem_limit),
    )(*streams)

    # Combine per-core / per-lane partials and apply the PRF1 formula: a
    # handful of scalar ops, done in plain JAX (per the performance review).
    c4 = partials.sum(axis=(0, 2))                 # [TP, FP, TN, FN]
    tp, fp, tn, fn = c4[0], c4[1], c4[2], c4[3]
    has_tp = tp != 0.0
    p = jnp.where(has_tp, tp / jnp.where(has_tp, tp + fp, 1.0), 0.0)
    r = jnp.where(has_tp, tp / jnp.where(has_tp, tp + fn, 1.0), 0.0)
    pr = p + r
    f1 = jnp.where(has_tp, 2.0 * p * r / jnp.where(pr != 0.0, pr, 1.0), 0.0)
    total = tp + fp + tn + fn
    # TODO(synk): torch leaves `accuracy` undefined (would raise) when the
    # total weighted count is 0; we return 0 in that degenerate case.
    accuracy = jnp.where(total != 0.0,
                         (tp + tn) / jnp.where(total != 0.0, total, 1.0), 0.0)
    return {"P": p, "R": r, "F1": f1, "accuracy": accuracy,
            "TP": tp, "FP": fp, "TN": tn, "FN": fn}


def _reference(logits, labels, weight):
    preds = jnp.argmax(logits, axis=-1).astype(jnp.float32)
    labels = labels.astype(jnp.float32)
    tp = jnp.sum(preds * labels * weight)
    fp = jnp.sum(preds * (1 - labels) * weight)
    tn = jnp.sum((1 - preds) * (1 - labels) * weight)
    fn = jnp.sum((1 - preds) * labels * weight)
    p = jnp.where(tp != 0, tp / (tp + fp), 0.0)
    r = jnp.where(tp != 0, tp / (tp + fn), 0.0)
    f1 = jnp.where(tp != 0, 2 * p * r / (p + r), 0.0)
    acc = (tp + tn) / (tp + fp + tn + fn)
    return dict(P=p, R=r, F1=f1, accuracy=acc, TP=tp, FP=fp, TN=tn, FN=fn)


if __name__ == "__main__":
    key = jax.random.PRNGKey(0)

    def check(out, ref):
        for name in ("P", "R", "F1", "accuracy", "TP", "FP", "TN", "FN"):
            assert jnp.allclose(out[name], ref[name], rtol=1e-4, atol=1e-3), (
                name, out[name], ref[name])

    # Case 1: binary logits, explicit weight (4 "batch items" x 8 samples).
    k1, k2, k3 = jax.random.split(key, 3)
    B, N, C = 4, 8, 2
    logits = jax.random.normal(k1, (B, N, C), dtype=jnp.float32)
    labels = jax.random.bernoulli(k2, 0.5, (B, N)).astype(jnp.int32)
    weight = jax.random.uniform(k3, (B, N), jnp.float32, 0.5, 1.5)
    out = prf1_tracker_forward(logits, labels, weight)
    jax.block_until_ready(out)
    check(out, _reference(logits, labels, weight))

    # Case 2: weight=None path (specialized kernel, no ones() materialized).
    out2 = prf1_tracker_forward(logits, labels, None)
    jax.block_until_ready(out2)
    check(out2, _reference(logits, labels, jnp.ones((B, N), jnp.float32)))

    # Case 3: sample count not a multiple of 128, C > 2, bf16 logits.
    k4, k5, k6 = jax.random.split(k1, 3)
    B2, N2, C2 = 3, 50, 3
    logits2 = jax.random.normal(k4, (B2, N2, C2), dtype=jnp.bfloat16)
    labels2 = jax.random.bernoulli(k5, 0.5, (B2, N2)).astype(jnp.int32)
    weight2 = jax.random.uniform(k6, (B2, N2), jnp.float32, 0.5, 1.5)
    out3 = prf1_tracker_forward(logits2, labels2, weight2)
    jax.block_until_ready(out3)
    check(out3, _reference(logits2, labels2, weight2))

    print("KERNEL_OK")
</pallas_src>

<mosaic_0001>
module attributes {stable_mosaic.version = 11 : i64} {
  func.func @kernel(%arg0: i32, %arg1: i32, %arg2: memref<1x128xi8, #tpu.memory_space<vmem>>, %arg3: memref<1x128xi32, #tpu.memory_space<vmem>>, %arg4: memref<1x128xf32, #tpu.memory_space<vmem>>, %arg5: memref<1x4x128xf32, #tpu.memory_space<vmem>>, %arg6: memref<4x128xf32, #tpu.memory_space<vmem>>) attributes {dimension_semantics = [#tpu.dimension_semantics<parallel>, #tpu.dimension_semantics<arbitrary>], iteration_bounds = array<i64: 2, 1>, scalar_prefetch = 0 : i64, scratch_operands = 1 : i64, tpu.core_type = #tpu.core_type<tc>, window_params = [{transform_indices = @transform_0, window_bounds = array<i64: 1, 128>}, {transform_indices = @transform_1, window_bounds = array<i64: 1, 128>}, {transform_indices = @transform_2, window_bounds = array<i64: 1, 128>}, {transform_indices = @transform_3, window_bounds = array<i64: 1, 4, 128>}]} {
    %c0_i32 = arith.constant 0 : i32
    %0 = arith.cmpi eq, %arg1, %c0_i32 : i32
    %1 = arith.extui %0 : i1 to i32
    %c0_i32_0 = arith.constant 0 : i32
    %2 = arith.cmpi ne, %1, %c0_i32_0 : i32
    scf.if %2 {
      %cst_27 = arith.constant 0.000000e+00 : f32
      %53 = vector.broadcast %cst_27 : f32 to vector<4x128xf32>
      %c0_28 = arith.constant 0 : index
      %c0_29 = arith.constant 0 : index
      %54 = vector.load %arg6[%c0_28, %c0_29] : memref<4x128xf32, #tpu.memory_space<vmem>>, vector<4x128xf32>
      tpu.vector_store %arg6[%c0_28, %c0_29], %53 {strides = array<i32>} : memref<4x128xf32, #tpu.memory_space<vmem>>, vector<4x128xf32>,
    } else {
    }
    %3 = tpu.iota {dimensions = array<i32: 0>} : vector<1x128xi32>
    %4 = tpu.iota {dimensions = array<i32: 1>} : vector<1x128xi32>
    %c1_i32 = arith.constant 1 : i32
    %5 = arith.muli %arg0, %c1_i32 : i32
    %6 = arith.addi %5, %arg1 : i32
    %c128_i32 = arith.constant 128 : i32
    %7 = arith.muli %6, %c128_i32 : i32
    %c128_i32_1 = arith.constant 128 : i32
    %8 = vector.broadcast %c128_i32_1 : i32 to vector<1x128xi32>
    %9 = arith.muli %3, %8 : vector<1x128xi32>
    %10 = vector.broadcast %7 : i32 to vector<1x128xi32>
    %11 = arith.addi %10, %9 : vector<1x128xi32>
    %12 = arith.addi %11, %4 : vector<1x128xi32>
    %c32_i32 = arith.constant 32 : i32
    %13 = vector.broadcast %c32_i32 : i32 to vector<1x128xi32>
    %14 = arith.cmpi slt, %12, %13 : vector<1x128xi32>
    %c0 = arith.constant 0 : index
    %c0_2 = arith.constant 0 : index
    %15 = vector.load %arg2[%c0, %c0_2] : memref<1x128xi8, #tpu.memory_space<vmem>>, vector<1x128xi8>
    %16 = arith.sitofp %15 : vector<1x128xi8> to vector<1x128xf32>
    %c0_3 = arith.constant 0 : index
    %c0_4 = arith.constant 0 : index
    %17 = vector.load %arg3[%c0_3, %c0_4] : memref<1x128xi32, #tpu.memory_space<vmem>>, vector<1x128xi32>
    %18 = arith.sitofp %17 : vector<1x128xi32> to vector<1x128xf32>
    %cst = arith.constant 0.000000e+00 : f32
    %19 = vector.broadcast %cst : f32 to vector<1x128xf32>
    %20 = arith.select %14, %18, %19 : vector<1x128xi1>, vector<1x128xf32>
    %c0_5 = arith.constant 0 : index
    %c0_6 = arith.constant 0 : index
    %21 = vector.load %arg4[%c0_5, %c0_6] : memref<1x128xf32, #tpu.memory_space<vmem>>, vector<1x128xf32>
    %cst_7 = arith.constant 0.000000e+00 : f32
    %22 = vector.broadcast %cst_7 : f32 to vector<1x128xf32>
    %23 = arith.select %14, %21, %22 : vector<1x128xi1>, vector<1x128xf32>
    %24 = arith.mulf %16, %23 : vector<1x128xf32>
    %25 = arith.subf %23, %24 : vector<1x128xf32>
    %26 = arith.mulf %24, %20 : vector<1x128xf32>
    %27 = arith.subf %24, %26 : vector<1x128xf32>
    %28 = arith.mulf %25, %20 : vector<1x128xf32>
    %29 = arith.subf %25, %28 : vector<1x128xf32>
    %c0_8 = arith.constant 0 : index
    %c0_9 = arith.constant 0 : index
    %30 = vector.load %arg6[%c0_8, %c0_9] : memref<4x128xf32, #tpu.memory_space<vmem>>, vector<1x128xf32>
    %cst_10 = arith.constant dense<0.000000e+00> : vector<128xf32>
    %31 = vector.multi_reduction <add>, %26, %cst_10 [0] : vector<1x128xf32> to vector<128xf32>
    %32 = vector.shape_cast %31 : vector<128xf32> to vector<1x128xf32>
    %33 = arith.addf %30, %32 : vector<1x128xf32>
    %c0_11 = arith.constant 0 : index
    %c0_12 = arith.constant 0 : index
    %34 = vector.load %arg6[%c0_11, %c0_12] : memref<4x128xf32, #tpu.memory_space<vmem>>, vector<1x128xf32>
    tpu.vector_store %arg6[%c0_11, %c0_12], %33 {strides = array<i32>} : memref<4x128xf32, #tpu.memory_space<vmem>>, vector<1x128xf32>,
    %c1 = arith.constant 1 : index
    %c0_13 = arith.constant 0 : index
    %35 = vector.load %arg6[%c1, %c0_13] : memref<4x128xf32, #tpu.memory_space<vmem>>, vector<1x128xf32>
    %cst_14 = arith.constant dense<0.000000e+00> : vector<128xf32>
    %36 = vector.multi_reduction <add>, %27, %cst_14 [0] : vector<1x128xf32> to vector<128xf32>
    %37 = vector.shape_cast %36 : vector<128xf32> to vector<1x128xf32>
    %38 = arith.addf %35, %37 : vector<1x128xf32>
    %c1_15 = arith.constant 1 : index
    %c0_16 = arith.constant 0 : index
    %39 = vector.load %arg6[%c1_15, %c0_16] : memref<4x128xf32, #tpu.memory_space<vmem>>, vector<1x128xf32>
    tpu.vector_store %arg6[%c1_15, %c0_16], %38 {strides = array<i32>} : memref<4x128xf32, #tpu.memory_space<vmem>>, vector<1x128xf32>,
    %c2 = arith.constant 2 : index
    %c0_17 = arith.constant 0 : index
    %40 = vector.load %arg6[%c2, %c0_17] : memref<4x128xf32, #tpu.memory_space<vmem>>, vector<1x128xf32>
    %cst_18 = arith.constant dense<0.000000e+00> : vector<128xf32>
    %41 = vector.multi_reduction <add>, %29, %cst_18 [0] : vector<1x128xf32> to vector<128xf32>
    %42 = vector.shape_cast %41 : vector<128xf32> to vector<1x128xf32>
    %43 = arith.addf %40, %42 : vector<1x128xf32>
    %c2_19 = arith.constant 2 : index
    %c0_20 = arith.constant 0 : index
    %44 = vector.load %arg6[%c2_19, %c0_20] : memref<4x128xf32, #tpu.memory_space<vmem>>, vector<1x128xf32>
    tpu.vector_store %arg6[%c2_19, %c0_20], %43 {strides = array<i32>} : memref<4x128xf32, #tpu.memory_space<vmem>>, vector<1x128xf32>,
    %c3 = arith.constant 3 : index
    %c0_21 = arith.constant 0 : index
    %45 = vector.load %arg6[%c3, %c0_21] : memref<4x128xf32, #tpu.memory_space<vmem>>, vector<1x128xf32>
    %cst_22 = arith.constant dense<0.000000e+00> : vector<128xf32>
    %46 = vector.multi_reduction <add>, %28, %cst_22 [0] : vector<1x128xf32> to vector<128xf32>
    %47 = vector.shape_cast %46 : vector<128xf32> to vector<1x128xf32>
    %48 = arith.addf %45, %47 : vector<1x128xf32>
    %c3_23 = arith.constant 3 : index
    %c0_24 = arith.constant 0 : index
    %49 = vector.load %arg6[%c3_23, %c0_24] : memref<4x128xf32, #tpu.memory_space<vmem>>, vector<1x128xf32>
    tpu.vector_store %arg6[%c3_23, %c0_24], %48 {strides = array<i32>} : memref<4x128xf32, #tpu.memory_space<vmem>>, vector<1x128xf32>,
    %c0_i32_25 = arith.constant 0 : i32
    %50 = arith.cmpi eq, %arg1, %c0_i32_25 : i32
    %51 = arith.extui %50 : i1 to i32
    %c0_i32_26 = arith.constant 0 : i32
    %52 = arith.cmpi ne, %51, %c0_i32_26 : i32
    scf.if %52 {
      %c0_27 = arith.constant 0 : index
      %c0_28 = arith.constant 0 : index
      %53 = vector.load %arg6[%c0_27, %c0_28] : memref<4x128xf32, #tpu.memory_space<vmem>>, vector<4x128xf32>
      %c0_29 = arith.constant 0 : index
      %c0_30 = arith.constant 0 : index
      %c0_31 = arith.constant 0 : index
      %54 = vector.load %arg5[%c0_29, %c0_30, %c0_31] : memref<1x4x128xf32, #tpu.memory_space<vmem>>, vector<1x4x128xf32>
      %55 = vector.shape_cast %54 : vector<1x4x128xf32> to vector<4x128xf32>
      %56 = vector.shape_cast %53 : vector<4x128xf32> to vector<1x4x128xf32>
      tpu.vector_store %arg5[%c0_29, %c0_30, %c0_31], %56 {strides = array<i32>} : memref<1x4x128xf32, #tpu.memory_space<vmem>>, vector<1x4x128xf32>,
    } else {
    }
    return
  }
  func.func @transform_0(%arg0: i32, %arg1: i32) -> (i32, i32) {
    %c1_i32 = arith.constant 1 : i32
    %0 = arith.muli %arg0, %c1_i32 : i32
    %1 = arith.addi %0, %arg1 : i32
    %c0_i32 = arith.constant 0 : i32
    %2 = arith.minsi %1, %c0_i32 : i32
    %c0_i32_0 = arith.constant 0 : i32
    %c0_i32_1 = arith.constant 0 : i32
    return %2, %c0_i32_0 : i32, i32
  }
  func.func @transform_1(%arg0: i32, %arg1: i32) -> (i32, i32) {
    %c1_i32 = arith.constant 1 : i32
    %0 = arith.muli %arg0, %c1_i32 : i32
    %1 = arith.addi %0, %arg1 : i32
    %c0_i32 = arith.constant 0 : i32
    %2 = arith.minsi %1, %c0_i32 : i32
    %c0_i32_0 = arith.constant 0 : i32
    %c0_i32_1 = arith.constant 0 : i32
    return %2, %c0_i32_0 : i32, i32
  }
  func.func @transform_2(%arg0: i32, %arg1: i32) -> (i32, i32) {
    %c1_i32 = arith.constant 1 : i32
    %0 = arith.muli %arg0, %c1_i32 : i32
    %1 = arith.addi %0, %arg1 : i32
    %c0_i32 = arith.constant 0 : i32
    %2 = arith.minsi %1, %c0_i32 : i32
    %c0_i32_0 = arith.constant 0 : i32
    %c0_i32_1 = arith.constant 0 : i32
    return %2, %c0_i32_0 : i32, i32
  }
  func.func @transform_3(%arg0: i32, %arg1: i32) -> (i32, i32, i32) {
    %c0_i32 = arith.constant 0 : i32
    %c0_i32_0 = arith.constant 0 : i32
    %c0_i32_1 = arith.constant 0 : i32
    return %arg0, %c0_i32, %c0_i32_0 : i32, i32, i32
  }
}

</mosaic_0001>

<llo_original>
// kernel: tpu_custom_call.1
$region0: #{tpu_custom_call.1}
  #allocation0 [shape = 'u32[]', space=smem, size = 0x4, offset = 0x4, fixed_abs, tag = 'smem constant byte address 0x4 - core index']
  #allocation1 [shape = 'u32[144,128]{1,0:T(1,128)}', space=vmem, size = 0x12000, scoped, tag = 'internal scratch']
  #allocation2 [shape = 'f32[4,128]{1,0:T(4,128)}', space=vmem, size = 0x800, scoped, tag = 'scratch operand']
  %s0 = inlined_call_operand.hbm [shape: s8[1,128], index: 0, kind: input, shape index: {}]
  %s1 = inlined_call_operand.vmem [shape: s32[1,128], index: 1, kind: input, shape index: {}]
  %s2 = inlined_call_operand.vmem [shape: f32[1,128], index: 2, kind: input, shape index: {}]
  %s3 = inlined_call_operand.hbm [shape: f32[2,4,128], index: 3, kind: output, shape index: {}]
  %s4 = sld [smem:[#allocation0]]
  $region57: #{tpu_custom_call.1} parent=0
    _
  %s6 = ssub.s32 1, %s4
  %s7 = scalar_select 0, %s6, %s4
  $region1: #{tpu_custom_call.1} parent=0
    #allocation3 [shape = 'u8[1024]{0}', space=vmem, size = 0x400, scoped, tag = 'input window, operand 0']
    #allocation4 [shape = 's32[2]{0}', space=sflag, size = 0x8, scoped, tag = 'scoped memory for tpu_custom_call.1']
    #allocation5 [shape = 's32[2]{0}', space=sflag, size = 0x8, scoped, tag = 'scoped memory for tpu_custom_call.1']
    #allocation6 [shape = 'u8[4096]{0}', space=vmem, size = 0x1000, scoped, tag = 'output window, operand 0']
    %8 = vsyncpa [#allocation4], 0
    %s9 = scalar_lea.sflag [#allocation4], 1
    %10 = vsyncpa %s9, 0
    %11 = vsyncpa [#allocation5], 0
    %s12 = scalar_lea.sflag [#allocation5], 1
    %13 = vsyncpa %s12, 0
    loop: start=0, step=1, limit=4
    $region2: #{tpu_custom_call.1} parent=1 // loop_pre_header
      _
    $region3: #{tpu_custom_call.1} parent=1 // loop_header
      %s15 = sphi 0, %s19
      %p16 = scmp.ge.s32.totalorder %s15, 4
      %s22 = sphi 0, %s34
      %s23 = sphi 0, %s30
      %s24 = sphi 0, %s22
      %s25 = sphi 0, %s23
      %s26 = sphi 0, %s24
      %s27 = sphi 0, %s25
      %s43 = sphi 0, %s45
      %s46 = sphi 0, %s43
      %s47 = sphi 0, %s46
      %s63 = sphi 0, %s47
      %s75 = sphi 0, %s77
      %s78 = sphi 0, %s75
      %s79 = sphi 0, %s78
      %s95 = sphi 0, %s79
      %s107 = sphi 0, %s109
      %s110 = sphi 0, %s107
      %s111 = sphi 0, %s110
      %s127 = sphi 0, %s111
      %s133 = sphi 0, %s135
      %s136 = sphi 0, %s133
      %s137 = sphi 0, %s136
      %s153 = sphi 0, %s137
    $region4: #{tpu_custom_call.1} parent=1 // loop_header_branch
      %18 = sbr.rel (%p16) target = $region8
    $region5: #{tpu_custom_call.1} parent=1 // loop_body
      %s20 = ssub.s32 %s15, 1
      %s21 = ssub.s32 %s15, 2
      %s28 = sadd.s32 1, %s23
      %p29 = scmp.ge.s32.totalorder %s28, 1
      %s30 = scalar_select %p29, 0, %s28
      %s31 = sadd.s32 1, %s22
      %s32 = scalar_select %p29, %s31, %s22
      %p33 = scmp.ge.s32.totalorder %s32, 2
      %s34 = scalar_select %p33, 0, %s32
      %s35 = sadd.s32 %s22, %s23
      %p36 = scmp.lt.s32.totalorder %s35, 0
      %s37 = scalar_select %p36, %s35, 0
      %s38 = sadd.s32 %s34, %s30
      %p39 = scmp.lt.s32.totalorder %s38, 0
      %s40 = scalar_select %p39, %s38, 0
      %s41 = ssub.s32 %s37, %s40
      %p42 = scmp.eq.s32.totalorder %s41, 0
      %s44 = sadd.s32 %s43, 1
      %s45 = scalar_select %p42, %s43, %s44
      %p48 = pneg %p42
      %p49 = scmp.eq.s32.totalorder %s15, 1
      %p50 = por %p48, %p49
      %p51 = scmp.ne.s32.totalorder %s43, %s46
      %p52 = scmp.eq.s32.totalorder %s15, 0
      %p53 = por %p51, %p52
      %p54 = scmp.ne.s32.totalorder %s43, %s46
      %p55 = scmp.eq.s32.totalorder %s20, 1
      %p56 = por %p54, %p55
      %p57 = scmp.ne.s32.totalorder %s46, %s47
      %p58 = scmp.eq.s32.totalorder %s20, 0
      %p59 = por %p57, %p58
      %p60 = scmp.ne.s32.totalorder %s46, %s47
      %p61 = scmp.eq.s32.totalorder %s21, 1
      %p62 = por %p60, %p61
      %p64 = scmp.ne.s32.totalorder %s47, %s63
      %p65 = scmp.eq.s32.totalorder %s21, 0
      %p66 = por %p64, %p65
      %s67 = sadd.s32 %s22, %s23
      %p68 = scmp.lt.s32.totalorder %s67, 0
      %s69 = scalar_select %p68, %s67, 0
      %s70 = sadd.s32 %s34, %s30
      %p71 = scmp.lt.s32.totalorder %s70, 0
      %s72 = scalar_select %p71, %s70, 0
      %s73 = ssub.s32 %s69, %s72
      %p74 = scmp.eq.s32.totalorder %s73, 0
      %s76 = sadd.s32 %s75, 1
      %s77 = scalar_select %p74, %s75, %s76
      %p80 = pneg %p74
      %p81 = scmp.eq.s32.totalorder %s15, 1
      %p82 = por %p80, %p81
      %p83 = scmp.ne.s32.totalorder %s75, %s78
      %p84 = scmp.eq.s32.totalorder %s15, 0
      %p85 = por %p83, %p84
      %p86 = scmp.ne.s32.totalorder %s75, %s78
      %p87 = scmp.eq.s32.totalorder %s20, 1
      %p88 = por %p86, %p87
      %p89 = scmp.ne.s32.totalorder %s78, %s79
      %p90 = scmp.eq.s32.totalorder %s20, 0
      %p91 = por %p89, %p90
      %p92 = scmp.ne.s32.totalorder %s78, %s79
      %p93 = scmp.eq.s32.totalorder %s21, 1
      %p94 = por %p92, %p93
      %p96 = scmp.ne.s32.totalorder %s79, %s95
      %p97 = scmp.eq.s32.totalorder %s21, 0
      %p98 = por %p96, %p97
      %s99 = sadd.s32 %s22, %s23
      %p100 = scmp.lt.s32.totalorder %s99, 0
      %s101 = scalar_select %p100, %s99, 0
      %s102 = sadd.s32 %s34, %s30
      %p103 = scmp.lt.s32.totalorder %s102, 0
      %s104 = scalar_select %p103, %s102, 0
      %s105 = ssub.s32 %s101, %s104
      %p106 = scmp.eq.s32.totalorder %s105, 0
      %s108 = sadd.s32 %s107, 1
      %s109 = scalar_select %p106, %s107, %s108
      %p112 = pneg %p106
      %p113 = scmp.eq.s32.totalorder %s15, 1
      %p114 = por %p112, %p113
      %p115 = scmp.ne.s32.totalorder %s107, %s110
      %p116 = scmp.eq.s32.totalorder %s15, 0
      %p117 = por %p115, %p116
      %p118 = scmp.ne.s32.totalorder %s107, %s110
      %p119 = scmp.eq.s32.totalorder %s20, 1
      %p120 = por %p118, %p119
      %p121 = scmp.ne.s32.totalorder %s110, %s111
      %p122 = scmp.eq.s32.totalorder %s20, 0
      %p123 = por %p121, %p122
      %p124 = scmp.ne.s32.totalorder %s110, %s111
      %p125 = scmp.eq.s32.totalorder %s21, 1
      %p126 = por %p124, %p125
      %p128 = scmp.ne.s32.totalorder %s111, %s127
      %p129 = scmp.eq.s32.totalorder %s21, 0
      %p130 = por %p128, %p129
      %s131 = ssub.s32 %s22, %s34
      %p132 = scmp.eq.s32.totalorder %s131, 0
      %s134 = sadd.s32 %s133, 1
      %s135 = scalar_select %p132, %s133, %s134
      %p138 = pneg %p132
      %p139 = scmp.eq.s32.totalorder %s15, 1
      %p140 = por %p138, %p139
      %p141 = scmp.ne.s32.totalorder %s133, %s136
      %p142 = scmp.eq.s32.totalorder %s15, 0
      %p143 = por %p141, %p142
      %p144 = scmp.ne.s32.totalorder %s133, %s136
      %p145 = scmp.eq.s32.totalorder %s20, 1
      %p146 = por %p144, %p145
      %p147 = scmp.ne.s32.totalorder %s136, %s137
      %p148 = scmp.eq.s32.totalorder %s20, 0
      %p149 = por %p147, %p148
      %p150 = scmp.ne.s32.totalorder %s136, %s137
      %p151 = scmp.eq.s32.totalorder %s21, 1
      %p152 = por %p150, %p151
      %p154 = scmp.ne.s32.totalorder %s137, %s153
      %p155 = scmp.eq.s32.totalorder %s21, 0
      %p156 = por %p154, %p155
      %p157 = scmp.le.s32.totalorder 1, %s15
      %p158 = scmp.lt.s32.totalorder %s15, 3
      %p159 = pnand %p157, %p158
      %p160 = pneg %p159
      // Predicated region
      $region9: #{tpu_custom_call.1} parent=5 // pred_check
        _
      $region10: #{tpu_custom_call.1} parent=5 // pred_check_branch
        %162 = sbr.rel (%p159) target = $region12
      $region11: #{tpu_custom_call.1} parent=5 // pred_region
        %s163 = ssub.s32 %s15, 1
      $region12: #{tpu_custom_call.1} parent=5 // pred_fallthru
        _
      %p164 = scmp.lt.s32.totalorder %s15, 2
      // Predicated region
      $region13: #{tpu_custom_call.1} parent=5 // pred_check
        %p165 = pneg %p164
      $region14: #{tpu_custom_call.1} parent=5 // pred_check_branch
        %167 = sbr.rel (%p165) target = $region16
      $region15: #{tpu_custom_call.1} parent=5 // pred_region
        // Predicated region
        $region17: #{tpu_custom_call.1} parent=15 // pred_check
          %p168 = pneg %p53
        $region18: #{tpu_custom_call.1} parent=15 // pred_check_branch
          %170 = sbr.rel (%p168) target = $region20
        $region19: #{tpu_custom_call.1} parent=15 // pred_region
          %s171 = sand.u32 %s43, 1
          %s172 = scalar_lea.sflag [#allocation4], %s171
          %s173 = sand.u32 %s43, 1
          %s174 = scalar_lea.vmem [#allocation3], %s173
          %s175 = sadd.s32 %s22, %s23
          %p176 = scmp.lt.s32.totalorder %s175, 0
          %s177 = scalar_select %p176, %s175, 0
          %s179 = ssub.s32 16, 16
          %180 = vsyncadd %s172, %s179
          %s181 = smul.addr %s177, 16
          %s182 = scalar_lea.hbm %s0, %s181
          %s184 = sshll.u32 %s174, 4
          %s185 = int_to_ptr.vmem [resolvable:$true] %s184
          %187 = dma.hbm_to_vmem [thread:$0]  %s182, 16, %s185, %s172
        $region20: #{tpu_custom_call.1} parent=15 // pred_fallthru
          _
        // Predicated region
        $region21: #{tpu_custom_call.1} parent=15 // pred_check
          %p188 = pneg %p85
        $region22: #{tpu_custom_call.1} parent=15 // pred_check_branch
          %190 = sbr.rel (%p188) target = $region24
        $region23: #{tpu_custom_call.1} parent=15 // pred_region
          %s191 = sadd.s32 %s22, %s23
          %p192 = scmp.lt.s32.totalorder %s191, 0
          %s193 = scalar_select %p192, %s191, 0
          %p194 = scmp.lt.s32.totalorder %s193, 0
          %s195 = scalar_select %p194, %s193, 0
          %s196 = scalar_lea.vmem %s1, %s195
          %s197 = sadd.s32 %s22, %s23
          %p198 = scmp.lt.s32.totalorder %s197, 0
          %s199 = scalar_select %p198, %s197, 0
        $region24: #{tpu_custom_call.1} parent=15 // pred_fallthru
          _
        // Predicated region
        $region25: #{tpu_custom_call.1} parent=15 // pred_check
          %p200 = pneg %p117
        $region26: #{tpu_custom_call.1} parent=15 // pred_check_branch
          %202 = sbr.rel (%p200) target = $region28
        $region27: #{tpu_custom_call.1} parent=15 // pred_region
          %s203 = sadd.s32 %s22, %s23
          %p204 = scmp.lt.s32.totalorder %s203, 0
          %s205 = scalar_select %p204, %s203, 0
          %p206 = scmp.lt.s32.totalorder %s205, 0
          %s207 = scalar_select %p206, %s205, 0
          %s208 = scalar_lea.vmem %s2, %s207
          %s209 = sadd.s32 %s22, %s23
          %p210 = scmp.lt.s32.totalorder %s209, 0
          %s211 = scalar_select %p210, %s209, 0
        $region28: #{tpu_custom_call.1} parent=15 // pred_fallthru
          _
      $region16: #{tpu_custom_call.1} parent=5 // pred_fallthru
        _
      %p212 = scmp.le.s32.totalorder 1, %s15
      %p213 = scmp.lt.s32.totalorder %s15, 3
      %p214 = pnand %p212, %p213
      %p215 = pneg %p214
      // Predicated region
      $region29: #{tpu_custom_call.1} parent=5 // pred_check
        _
      $region30: #{tpu_custom_call.1} parent=5 // pred_check_branch
        %217 = sbr.rel (%p214) target = $region32
      $region31: #{tpu_custom_call.1} parent=5 // pred_region
        %s218 = ssub.s32 %s15, 1
        %s219 = sand.u32 %s46, 1
        %s220 = scalar_lea.sflag [#allocation4], %s219
        %s221 = sand.u32 %s46, 1
        %s222 = scalar_lea.vmem [#allocation3], %s221
        // Predicated region
        $region33: #{tpu_custom_call.1} parent=31 // pred_check
          %p223 = pneg %p59
        $region34: #{tpu_custom_call.1} parent=31 // pred_check_branch
          %225 = sbr.rel (%p223) target = $region36
        $region35: #{tpu_custom_call.1} parent=31 // pred_region
          %226 = dma.done %s220, 16
        $region36: #{tpu_custom_call.1} parent=31 // pred_fallthru
          _
        %s227 = sand.u32 %s46, 1
        %s228 = scalar_lea.sflag [#allocation4], %s227
        %s229 = sand.u32 %s46, 1
        %s230 = scalar_lea.vmem [#allocation3], %s229
        %p231 = pneg %p59
        %p232 = pneg %p56
        %s233 = sadd.s32 %s24, %s25
        %p234 = scmp.lt.s32.totalorder %s233, 0
        %s235 = scalar_select %p234, %s233, 0
        %p236 = scmp.lt.s32.totalorder %s235, 0
        %s237 = scalar_select %p236, %s235, 0
        %s238 = scalar_lea.vmem %s1, %s237
        %p239 = pneg %p91
        %p240 = pneg %p88
        %s241 = sadd.s32 %s24, %s25
        %p242 = scmp.lt.s32.totalorder %s241, 0
        %s243 = scalar_select %p242, %s241, 0
        %p244 = scmp.lt.s32.totalorder %s243, 0
        %s245 = scalar_select %p244, %s243, 0
        %s246 = scalar_lea.vmem %s2, %s245
        %p247 = pneg %p123
        %p248 = pneg %p120
        %p249 = pneg %p149
        %p250 = pneg %p146
        %s251 = sand.u32 %s136, 1
        %s252 = scalar_lea.sflag [#allocation5], %s251
        %s253 = sand.u32 %s136, 1
        %s254 = smul.addr %s253, 4
        %s255 = scalar_lea.vmem [#allocation6], %s254
        %s256 = sadd.s32 %s24, %s25
        %p257 = scmp.lt.s32.totalorder %s256, 0
        %s258 = scalar_select %p257, %s256, 0
        %s259 = sadd.s32 %s24, %s25
        %p260 = scmp.lt.s32.totalorder %s259, 0
        %s261 = scalar_select %p260, %s259, 0
        %p262 = scmp.lt.s32.totalorder %s261, 0
        %s263 = scalar_select %p262, %s261, 0
        %s264 = scalar_lea.vmem %s1, %s263
        %s265 = sadd.s32 %s24, %s25
        %p266 = scmp.lt.s32.totalorder %s265, 0
        %s267 = scalar_select %p266, %s265, 0
        %s268 = sadd.s32 %s24, %s25
        %p269 = scmp.lt.s32.totalorder %s268, 0
        %s270 = scalar_select %p269, %s268, 0
        %p271 = scmp.lt.s32.totalorder %s270, 0
        %s272 = scalar_select %p271, %s270, 0
        %s273 = scalar_lea.vmem %s2, %s272
        %s274 = sadd.s32 %s24, %s25
        %p275 = scmp.lt.s32.totalorder %s274, 0
        %s276 = scalar_select %p275, %s274, 0
        %p277 = scmp.eq.s32.totalorder %s25, 0
        // Predicated region
        $region37: #{tpu_custom_call.1} parent=31 // pred_check
          %p278 = pneg %p277
        $region38: #{tpu_custom_call.1} parent=31 // pred_check_branch
          %280 = sbr.rel (%p278) target = $region40
        $region39: #{tpu_custom_call.1} parent=31 // pred_region
          %281 = vst [vmem:[#allocation2] sm:$0xf] 0.0
        $region40: #{tpu_custom_call.1} parent=31 // pred_fallthru
          _
        %v282 = vlaneseq
        %v283 = vshrl.u32 %v282, 7
        %v284 = vlaneseq
        %v285 = vand.u32 %v284, 127
        %s286 = sadd.s32 %s24, %s25
        %s287 = smul.u32 %s286, 128
        %v288 = vmul.u32 %v283, 128
        %v289 = vstv %s287
        %v290 = vadd.s32 %v289, %v288
        %v291 = vadd.s32 %v290, %v285
        %vm292 = vcmp.lt.s32.totalorder %v291, 32
        %v293 = vld [vmem:[%s222] sm:$0x1]
        %v294 = vunpack.c.0.s8 %v293
        %v295 = vcvt.s32.f32 %v294
        %v296 = vld [vmem:[%s264] sm:$0x1]
        %v297 = vcvt.s32.f32 %v296
        %v298 = vsel %vm292, %v297, 0.0
        %v299 = vld [vmem:[%s273] sm:$0x1]
        %v300 = vsel %vm292, %v299, 0.0
        %v301 = vmul.f32 %v295, %v300
        %v302 = vsub.f32 %v300, %v301
        %v303 = vmul.f32 %v301, %v298
        %v304 = vsub.f32 %v301, %v303
        %v305 = vmul.f32 %v302, %v298
        %v306 = vsub.f32 %v302, %v305
        %v307 = vld [vmem:[#allocation2] sm:$0x1]
        %v308 = vadd.f32 %v303, 0.0
        %v309 = vadd.f32 %v307, %v308
        %310 = vst [vmem:[#allocation2] sm:$0x1] %v309
        %v311 = vld [vmem:[#allocation2 + $0x1] sm:$0x1]
        %v312 = vadd.f32 %v304, 0.0
        %v313 = vadd.f32 %v311, %v312
        %314 = vst [vmem:[#allocation2 + $0x1] sm:$0x1] %v313
        %v315 = vld [vmem:[#allocation2 + $0x2] sm:$0x1]
        %v316 = vadd.f32 %v306, 0.0
        %v317 = vadd.f32 %v315, %v316
        %318 = vst [vmem:[#allocation2 + $0x2] sm:$0x1] %v317
        %v319 = vld [vmem:[#allocation2 + $0x3] sm:$0x1]
        %v320 = vadd.f32 %v305, 0.0
        %v321 = vadd.f32 %v319, %v320
        %322 = vst [vmem:[#allocation2 + $0x3] sm:$0x1] %v321
        // Predicated region
        $region41: #{tpu_custom_call.1} parent=31 // pred_check
          %p323 = pneg %p277
        $region42: #{tpu_custom_call.1} parent=31 // pred_check_branch
          %325 = sbr.rel (%p323) target = $region44
        $region43: #{tpu_custom_call.1} parent=31 // pred_region
          %v326 = vld [vmem:[#allocation2] sm:$0xf]
          %327 = vst [vmem:[%s255] sm:$0xf] %v326
        $region44: #{tpu_custom_call.1} parent=31 // pred_fallthru
          _
        %s328 = sand.u32 %s136, 1
        %s329 = scalar_lea.sflag [#allocation5], %s328
        %s330 = sand.u32 %s136, 1
        %s331 = smul.addr %s330, 4
        %s332 = scalar_lea.vmem [#allocation6], %s331
        // Predicated region
        $region45: #{tpu_custom_call.1} parent=31 // pred_check
          %p333 = pneg %p146
        $region46: #{tpu_custom_call.1} parent=31 // pred_check_branch
          %335 = sbr.rel (%p333) target = $region48
        $region47: #{tpu_custom_call.1} parent=31 // pred_region
          %s337 = ssub.s32 64, 64
          %338 = vsyncadd %s329, %s337
          %s339 = smul.addr %s24, 64
          %s340 = scalar_lea.hbm %s3, %s339
          %s342 = sshll.u32 %s332, 4
          %s343 = int_to_ptr.vmem [resolvable:$true] %s342
          %345 = dma.vmem_to_hbm [thread:$0]  %s343, 64, %s340, %s329
        $region48: #{tpu_custom_call.1} parent=31 // pred_fallthru
          _
      $region32: #{tpu_custom_call.1} parent=5 // pred_fallthru
        _
      %p346 = scmp.le.s32.totalorder 2, %s15
      // Predicated region
      $region49: #{tpu_custom_call.1} parent=5 // pred_check
        %p347 = pneg %p346
      $region50: #{tpu_custom_call.1} parent=5 // pred_check_branch
        %349 = sbr.rel (%p347) target = $region52
      $region51: #{tpu_custom_call.1} parent=5 // pred_region
        %s350 = ssub.s32 %s15, 2
        // Predicated region
        $region53: #{tpu_custom_call.1} parent=51 // pred_check
          %p351 = pneg %p152
        $region54: #{tpu_custom_call.1} parent=51 // pred_check_branch
          %353 = sbr.rel (%p351) target = $region56
        $region55: #{tpu_custom_call.1} parent=51 // pred_region
          %s354 = sand.u32 %s137, 1
          %s355 = scalar_lea.sflag [#allocation5], %s354
          %s356 = sand.u32 %s137, 1
          %s357 = smul.addr %s356, 4
          %s358 = scalar_lea.vmem [#allocation6], %s357
          %359 = dma.done %s355, 64
        $region56: #{tpu_custom_call.1} parent=51 // pred_fallthru
          _
      $region52: #{tpu_custom_call.1} parent=5 // pred_fallthru
        _
    $region6: #{tpu_custom_call.1} parent=1 // loop_footer
      %s19 = sadd.s32 1, %s15
    $region7: #{tpu_custom_call.1} parent=1 // loop_footer_branch
      %14 = sbr.rel target = $region3
    $region8: #{tpu_custom_call.1} parent=1 // loop_exit
      _
    %360 = vsyncpa [#allocation4], 1
    %s361 = scalar_lea.sflag [#allocation4], 1
    %362 = vsyncpa %s361, 1
    %363 = vsyncpa [#allocation5], 1
    %s364 = scalar_lea.sflag [#allocation5], 1
    %365 = vsyncpa %s364, 1

</llo_original>
